<compile_context>
chip_gen: v7x
topology: tpu7x:2x2x1
jax: 0.10.0
libtpu: 0.0.40
codegen_flags: <defaults>
</compile_context>

<pallas_src>
import math

import jax
import jax.numpy as jnp
from jax.experimental import pallas as pl
from jax.experimental.pallas import tpu as pltpu


def _drop_path_kernel(scale_ref, x_ref, o_ref):
    # scale_ref: (Bt, 1, 1) or (Bt, 1) float32, value is 0.0 or 1/keep_prob.
    # Multiply in f32, cast on store (keeps bf16/fp16 inputs accurate).
    o_ref[...] = (x_ref[...].astype(jnp.float32) * scale_ref[...]).astype(o_ref.dtype)


def drop_path_pallas(x, drop_prob: float = 0.0, training: bool = False,
                     *, key=None, seed: int = 0):
    """Pallas equivalent of timm's drop_path(x, drop_prob, training)."""
    if drop_prob == 0.0 or not training:
        return x

    keep_prob = 1.0 - drop_prob
    B = x.shape[0]
    N = math.prod(x.shape[1:])

    # Per-sample scale: floor(keep_prob + U[0,1)) / keep_prob, in float32.
    if key is None:
        key = jax.random.PRNGKey(seed)
    u = jax.random.uniform(key, (B,), dtype=jnp.float32)
    scale = jnp.floor(jnp.float32(keep_prob) + u) * jnp.float32(1.0 / keep_prob)

    itemsize = jnp.dtype(x.dtype).itemsize
    sublane = 8 * max(1, 4 // itemsize)        # 8 f32, 16 bf16/f16, 32 int8/fp8
    TARGET = 4 << 20                           # ~4 MiB x-block
    BT_CAP = 512                               # bounds the padded (Bt,8,128) scale tile in VMEM

    ragged = (N % 128) != 0

    if ragged and N * itemsize <= (6 << 20):
        # Ragged feature count that still fits one block: keep the last dim at
        # the full, un-padded extent (full-extent exception) and tile over the
        # batch only.  Avoids pad + un-pad full-tensor HBM copies entirely.
        x_in = x.reshape(B, N)
        bt = min(B, BT_CAP, max(1, TARGET // (N * itemsize)))
        if bt != B:
            bt = min(B, max(sublane, (bt // sublane) * sublane)) if B > sublane else B
        grid = (pl.cdiv(B, bt),)
        scale_in = scale.reshape(B, 1)
        in_specs = [pl.BlockSpec((bt, 1), lambda bi: (bi, 0)),
                    pl.BlockSpec((bt, N), lambda bi: (bi, 0))]
        out_specs = pl.BlockSpec((bt, N), lambda bi: (bi, 0))
        out_shape = jax.ShapeDtypeStruct((B, N), x.dtype)
        unpad = None
    else:
        # Lane-dense (B, rows, 128) layout.  For N % 128 == 0 this is a pure
        # reshape: no pad, no un-pad slice.
        pad = (-N) % 128
        xf = x.reshape(B, N)
        if pad:
            # TODO(synk): only taken for huge ragged N; still pays pad/slice copies.
            xf = jnp.pad(xf, ((0, 0), (0, pad)))
        Np = N + pad
        rows = Np // 128
        x_in = xf.reshape(B, rows, 128)

        row_bytes = 128 * itemsize
        if B == 1 or rows * row_bytes >= TARGET:
            # One sample already fills a block: tile over rows.
            bt = 1
            tile_rows = min(rows,
                            max(sublane, (TARGET // row_bytes) // sublane * sublane))
        else:
            # Small per-sample feature count: batch samples per block to
            # amortize per-grid-step pipeline overhead (big win on small shapes).
            tile_rows = rows
            bt = min(B, BT_CAP, max(1, TARGET // (rows * row_bytes)))
        grid = (pl.cdiv(B, bt), pl.cdiv(rows, tile_rows))
        scale_in = scale.reshape(B, 1, 1)
        in_specs = [pl.BlockSpec((bt, 1, 1), lambda bi, ri: (bi, 0, 0)),
                    pl.BlockSpec((bt, tile_rows, 128), lambda bi, ri: (bi, ri, 0))]
        out_specs = pl.BlockSpec((bt, tile_rows, 128), lambda bi, ri: (bi, ri, 0))
        out_shape = jax.ShapeDtypeStruct((B, rows, 128), x.dtype)
        unpad = (Np, N) if pad else None

    out = pl.pallas_call(
        _drop_path_kernel,
        out_shape=out_shape,
        grid=grid,
        in_specs=in_specs,
        out_specs=out_specs,
        compiler_params=pltpu.CompilerParams(
            dimension_semantics=("parallel",) * len(grid),
            vmem_limit_bytes=32 * 1024 * 1024,
        ),
    )(scale_in, x_in)

    if unpad is not None:
        out = out.reshape(B, unpad[0])[:, :unpad[1]]
    return out.reshape(x.shape)


class DropPath:
    """Mirror of the PyTorch DropPath module (forward only)."""

    def __init__(self, drop_prob=None):
        self.drop_prob = 0.0 if drop_prob is None else float(drop_prob)
        self.training = True

    def __call__(self, x, key=None, seed: int = 0):
        return drop_path_pallas(x, self.drop_prob, self.training,
                                key=key, seed=seed)


if __name__ == "__main__":
    key = jax.random.PRNGKey(0)
    B, C, H, W = 2, 4, 16, 16
    x = jax.random.normal(key, (B, C, H, W), dtype=jnp.float32)

    drop_prob = 0.25
    module = DropPath(drop_prob)
    module.training = True

    y = module(x, seed=0)
    y = jax.block_until_ready(y)

    # Sanity: each sample is either exactly zeroed or ~= x / keep_prob.
    keep_prob = 1.0 - drop_prob
    ok = True
    for b in range(B):
        yb = y[b]
        xb = x[b] / keep_prob
        zero_match = bool(jnp.allclose(yb, jnp.zeros_like(yb)))
        keep_match = bool(jnp.allclose(yb, xb, rtol=1e-5, atol=1e-5))
        if not (zero_match or keep_match):
            ok = False

    # Eval / drop_prob=0 path must be identity.
    module.training = False
    y_eval = jax.block_until_ready(module(x, seed=0))
    if not bool(jnp.array_equal(y_eval, x)):
        ok = False

    if ok:
        print("KERNEL_OK")
    else:
        print("KERNEL_MISMATCH")
</pallas_src>

<mosaic_0001>
module attributes {stable_mosaic.version = 11 : i64} {
  func.func @_drop_path_kernel(%arg0: i32, %arg1: i32, %arg2: memref<2x1x1xf32, #tpu.memory_space<vmem>>, %arg3: memref<2x8x128xf32, #tpu.memory_space<vmem>>, %arg4: memref<2x8x128xf32, #tpu.memory_space<vmem>>) attributes {dimension_semantics = [#tpu.dimension_semantics<parallel>, #tpu.dimension_semantics<parallel>], iteration_bounds = array<i64: 1, 1>, scalar_prefetch = 0 : i64, scratch_operands = 0 : i64, tpu.core_type = #tpu.core_type<tc>, window_params = [{transform_indices = @transform_0, window_bounds = array<i64: 2, 1, 1>}, {transform_indices = @transform_1, window_bounds = array<i64: 2, 8, 128>}, {transform_indices = @transform_2, window_bounds = array<i64: 2, 8, 128>}]} {
    %c0 = arith.constant 0 : index
    %c0_0 = arith.constant 0 : index
    %c0_1 = arith.constant 0 : index
    %0 = vector.load %arg3[%c0, %c0_0, %c0_1] : memref<2x8x128xf32, #tpu.memory_space<vmem>>, vector<2x8x128xf32>
    %c0_2 = arith.constant 0 : index
    %c0_3 = arith.constant 0 : index
    %c0_4 = arith.constant 0 : index
    %1 = vector.load %arg2[%c0_2, %c0_3, %c0_4] : memref<2x1x1xf32, #tpu.memory_space<vmem>>, vector<2x1x1xf32>
    %2 = vector.broadcast %1 : vector<2x1x1xf32> to vector<2x8x128xf32>
    %3 = arith.mulf %0, %2 : vector<2x8x128xf32>
    %c0_5 = arith.constant 0 : index
    %c0_6 = arith.constant 0 : index
    %c0_7 = arith.constant 0 : index
    %4 = vector.load %arg4[%c0_5, %c0_6, %c0_7] : memref<2x8x128xf32, #tpu.memory_space<vmem>>, vector<2x8x128xf32>
    tpu.vector_store %arg4[%c0_5, %c0_6, %c0_7], %3 {strides = array<i32>} : memref<2x8x128xf32, #tpu.memory_space<vmem>>, vector<2x8x128xf32>,
    return
  }
  func.func @transform_0(%arg0: i32, %arg1: i32) -> (i32, i32, i32) {
    %c0_i32 = arith.constant 0 : i32
    %c0_i32_0 = arith.constant 0 : i32
    %c0_i32_1 = arith.constant 0 : i32
    return %arg0, %c0_i32, %c0_i32_0 : i32, i32, i32
  }
  func.func @transform_1(%arg0: i32, %arg1: i32) -> (i32, i32, i32) {
    %c0_i32 = arith.constant 0 : i32
    %c0_i32_0 = arith.constant 0 : i32
    return %arg0, %arg1, %c0_i32 : i32, i32, i32
  }
  func.func @transform_2(%arg0: i32, %arg1: i32) -> (i32, i32, i32) {
    %c0_i32 = arith.constant 0 : i32
    %c0_i32_0 = arith.constant 0 : i32
    return %arg0, %arg1, %c0_i32 : i32, i32, i32
  }
}

</mosaic_0001>

<llo_original>
// kernel: tpu_custom_call.1
$region0: #{tpu_custom_call.1}
  #allocation0 [shape = 'u32[]', space=smem, size = 0x4, offset = 0x4, fixed_abs, tag = 'smem constant byte address 0x4 - core index']
  #allocation1 [shape = 'u32[144,128]{1,0:T(1,128)}', space=vmem, size = 0x12000, scoped, tag = 'internal scratch']
  %s0 = inlined_call_operand.vmem [shape: f32[2,1,1], index: 0, kind: input, shape index: {}]
  %s1 = inlined_call_operand.hbm [shape: f32[2,8,128], index: 1, kind: input, shape index: {}]
  %s2 = inlined_call_operand.hbm [shape: f32[2,8,128], index: 2, kind: output, shape index: {}]
  %s3 = sld [smem:[#allocation0]]
  $region22: #{tpu_custom_call.1} parent=0
    _
  %s5 = ssub.s32 1, %s3
  %s6 = scalar_select 0, %s5, %s3
  $region1: #{tpu_custom_call.1} parent=0
    #allocation2 [shape = 'u8[8192]{0}', space=vmem, size = 0x2000, scoped, tag = 'input window, operand 1, single buffered']
    #allocation3 [shape = 's32[1]{0}', space=sflag, size = 0x4, scoped, tag = 'scoped memory for tpu_custom_call.1']
    #allocation4 [shape = 's32[1]{0}', space=sflag, size = 0x4, scoped, tag = 'scoped memory for tpu_custom_call.1']
    #allocation5 [shape = 'u8[8192]{0}', space=vmem, size = 0x2000, scoped, tag = 'output window, operand 0, single buffered']
    %7 = vsyncpa [#allocation3], 0
    %8 = vsyncpa [#allocation4], 0
    // Predicated region
    $region2: #{tpu_custom_call.1} parent=1 // pred_check
      _
    $region3: #{tpu_custom_call.1} parent=1 // pred_check_branch
      %10 = sbr.rel (0) target = $region5
    $region4: #{tpu_custom_call.1} parent=1 // pred_region
      _
    $region5: #{tpu_custom_call.1} parent=1 // pred_fallthru
      _
    // Predicated region
    $region6: #{tpu_custom_call.1} parent=1 // pred_check
      _
    $region7: #{tpu_custom_call.1} parent=1 // pred_check_branch
      %12 = sbr.rel (0) target = $region9
    $region8: #{tpu_custom_call.1} parent=1 // pred_region
      %s14 = ssub.s32 256, 256
      %15 = vsyncadd [#allocation3], %s14
      %s16 = sshll.u32 [#allocation2], 4
      %s17 = int_to_ptr.vmem [resolvable:$true] %s16
      %22 = dma.hbm_to_vmem [thread:$0]  %s1, 256, %s17, [#allocation3], 128, 128, 8
    $region9: #{tpu_custom_call.1} parent=1 // pred_fallthru
      _
    // Predicated region
    $region10: #{tpu_custom_call.1} parent=1 // pred_check
      _
    $region11: #{tpu_custom_call.1} parent=1 // pred_check_branch
      %24 = sbr.rel (0) target = $region13
    $region12: #{tpu_custom_call.1} parent=1 // pred_region
      %25 = dma.done [#allocation3], 256
    $region13: #{tpu_custom_call.1} parent=1 // pred_fallthru
      _
    %v26 = vld [vmem:[#allocation2] sm:$0xff]
    %v27 = vld [vmem:[#allocation2 + $0x8] sm:$0xff]
    %v28 = vld [vmem:[%s0] sm:$0x1]
    %v29 = vld [vmem:[%s0 + $0x1] sm:$0x1]
    %v32 = vlaneseq
    %v33 = vshrl.u32 %v32, 7
    %v34 = vsub.s32 0, %v33
    %v35 = vrot.slane %v28, %v34
    %v36 = vlaneseq
    %v37 = vshrl.u32 %v36, 7
    %v38 = vsub.s32 0, %v37
    %v39 = vrot.slane %v29, %v38
    %40 = vset.pattern.permute.xlu0 0
    %41 = vperm.xlu0 %40, %v35
    %v42 = vpop.permute.xlu0 %41
    %44 = vset.pattern.permute.xlu0 0
    %45 = vperm.xlu0 %44, %v39
    %v46 = vpop.permute.xlu0 %45
    %v48 = vmul.f32 %v26, %v42
    %v49 = vmul.f32 %v27, %v46
    %50 = vst [vmem:[#allocation5] sm:$0xff] %v48
    %51 = vst [vmem:[#allocation5 + $0x8] sm:$0xff] %v49
    // Predicated region
    $region14: #{tpu_custom_call.1} parent=1 // pred_check
      _
    $region15: #{tpu_custom_call.1} parent=1 // pred_check_branch
      %53 = sbr.rel (0) target = $region17
    $region16: #{tpu_custom_call.1} parent=1 // pred_region
      %s55 = ssub.s32 256, 256
      %56 = vsyncadd [#allocation4], %s55
      %s57 = sshll.u32 [#allocation5], 4
      %s58 = int_to_ptr.vmem [resolvable:$true] %s57
      %63 = dma.vmem_to_hbm [thread:$0]  %s58, 256, %s2, [#allocation4], 128, 128, 8
    $region17: #{tpu_custom_call.1} parent=1 // pred_fallthru
      _
    // Predicated region
    $region18: #{tpu_custom_call.1} parent=1 // pred_check
      _
    $region19: #{tpu_custom_call.1} parent=1 // pred_check_branch
      %65 = sbr.rel (0) target = $region21
    $region20: #{tpu_custom_call.1} parent=1 // pred_region
      %66 = dma.done [#allocation4], 256
    $region21: #{tpu_custom_call.1} parent=1 // pred_fallthru
      _
    %67 = vsyncpa [#allocation3], 1
    %68 = vsyncpa [#allocation4], 1

</llo_original>
